<compile_context>
chip_gen: v7x
topology: tpu7x:2x2x1
jax: 0.10.0
libtpu: 0.0.40
codegen_flags: <defaults>
</compile_context>

<pallas_src>
import jax
import jax.numpy as jnp
import numpy as np
from jax.experimental import pallas as pl
from jax.experimental.pallas import tpu as pltpu


# ----------------------------- model dimensions ------------------------------
FRAME_LEN = 16      # L : encoder frame (conv kernel) length
HOP = 8             # S : encoder stride (50% overlap)
N_BASIS = 64        # N : encoder basis / bottleneck channels
HIDDEN = 64         # H : separator hidden channels


# ------------------------------- Pallas kernel --------------------------------
def _tasnet_kernel(frames_ref, weT_ref, w1T_ref, b1T_ref, w2T_ref, b2T_ref,
                   wdT_ref, out_ref):
    """One row-tile of frames per grid step (channels on sublanes, frames on lanes).

    frames_ref : (L, TM)  bf16   framed waveform, frame axis on lanes
    weT_ref    : (N, L)   bf16   encoder basis (transposed)
    w1T_ref    : (H, N)   bf16 / b1T_ref (H, 1) f32   separator layer 1
    w2T_ref    : (N, H)   bf16 / b2T_ref (N, 1) f32   separator layer 2 (mask head)
    wdT_ref    : (L, N)   bf16   decoder basis (transposed)
    out_ref    : (L, TM)  f32    enhanced frames (pre overlap-add)
    """
    x = frames_ref[...]                                               # (L, TM) bf16
    # Encoder: conv1d(kernel=L, stride=S) == matmul, + ReLU.  bf16 MXU, f32 acc.
    enc = jnp.maximum(
        jnp.dot(weT_ref[...], x, preferred_element_type=jnp.float32), 0.0)   # (N, TM)
    # Separator: two pointwise convs, ReLU then sigmoid mask.
    h = jnp.maximum(
        jnp.dot(w1T_ref[...], enc.astype(jnp.bfloat16),
                preferred_element_type=jnp.float32) + b1T_ref[...], 0.0)      # (H, TM)
    mask = jax.nn.sigmoid(
        jnp.dot(w2T_ref[...], h.astype(jnp.bfloat16),
                preferred_element_type=jnp.float32) + b2T_ref[...])           # (N, TM)
    masked = (enc * mask).astype(jnp.bfloat16)                                # (N, TM)
    # Decoder: transposed conv basis == matmul back to frame samples.
    out_ref[...] = jnp.dot(wdT_ref[...], masked,
                           preferred_element_type=jnp.float32)                # (L, TM)


def _prep_params(params):
    """Transpose weights for the lane-dense (channels x frames) layout, cast to bf16."""
    we, w1, b1, w2, b2, wd = params
    return (we.T.astype(jnp.bfloat16),    # (N, L)
            w1.T.astype(jnp.bfloat16),    # (H, N)
            b1.T.astype(jnp.float32),     # (H, 1)
            w2.T.astype(jnp.bfloat16),    # (N, H)
            b2.T.astype(jnp.float32),     # (N, 1)
            wd.T.astype(jnp.bfloat16))    # (L, N)


def _run_tasnet_frames(frames_flat, params):
    """frames_flat: (R, L) float32 -> enhanced frames (R, L) float32."""
    R, L = frames_flat.shape
    weT, w1T, b1T, w2T, b2T, wdT = _prep_params(params)
    N = weT.shape[0]
    H = w1T.shape[0]

    # Row tile: lane-dense (multiple of 128), large to amortize per-step overhead,
    # but no bigger than needed for small inputs.
    r128 = ((R + 127) // 128) * 128
    TM = min(1024, r128)
    R_pad = ((R + TM - 1) // TM) * TM
    grid = (R_pad // TM,)

    # Transpose so the frame/row axis lands on lanes; cast to bf16 (halves DMA bytes).
    frames_t = frames_flat.astype(jnp.bfloat16).T                    # (L, R)
    if R_pad != R:
        frames_t = jnp.pad(frames_t, ((0, 0), (0, R_pad - R)))

    rep = lambda i: (0, 0)   # weights: single full block, replicated per step

    weight_bytes = sum(int(w.size) * w.dtype.itemsize
                       for w in (weT, w1T, b1T, w2T, b2T, wdT))
    cost = pl.CostEstimate(
        flops=2 * R_pad * (L * N + N * H + H * N + N * L),
        transcendentals=R_pad * N,                                   # sigmoid exp
        bytes_accessed=R_pad * L * 2 + R_pad * L * 4 + weight_bytes)

    out_t = pl.pallas_call(
        _tasnet_kernel,
        out_shape=jax.ShapeDtypeStruct((L, R_pad), jnp.float32),
        grid_spec=pltpu.PrefetchScalarGridSpec(
            num_scalar_prefetch=0,
            grid=grid,
            in_specs=[
                pl.BlockSpec((L, TM), lambda i: (0, i)),             # frames (lane-dense)
                pl.BlockSpec(weT.shape, rep),                        # We^T
                pl.BlockSpec(w1T.shape, rep),                        # W1^T
                pl.BlockSpec(b1T.shape, rep),                        # b1^T
                pl.BlockSpec(w2T.shape, rep),                        # W2^T
                pl.BlockSpec(b2T.shape, rep),                        # b2^T
                pl.BlockSpec(wdT.shape, rep),                        # Wd^T
            ],
            out_specs=pl.BlockSpec((L, TM), lambda i: (0, i)),
        ),
        compiler_params=pltpu.CompilerParams(
            dimension_semantics=("parallel",)),                      # shards tiles across TCs (v7x)
        cost_estimate=cost,
    )(frames_t, weT, w1T, b1T, w2T, b2T, wdT)

    return out_t[:, :R].T                                            # (R, L) f32


# --------------------- JAX glue: reshape framing / overlap-add ------------------
def _enhance_batch(audio_2d, params):
    """audio_2d: (B, T) float32 -> (B, T) enhanced waveform.

    With HOP == FRAME_LEN/2 the framing is two interleaved non-overlapping
    reshapes (even-index frames start at 0, 16, ...; odd-index frames start at
    8, 24, ...); overlap-add is a shift-and-add of the two halves.
    """
    B, T = audio_2d.shape
    F = (T - FRAME_LEN) // HOP + 1
    T_used = (F - 1) * HOP + FRAME_LEN
    n_even = (F + 1) // 2
    n_odd = F // 2

    even = audio_2d[:, :n_even * FRAME_LEN].reshape(B * n_even, FRAME_LEN)
    odd = audio_2d[:, HOP:HOP + n_odd * FRAME_LEN].reshape(B * n_odd, FRAME_LEN)
    frames_flat = jnp.concatenate([even, odd], axis=0)               # (B*F, L)

    out_flat = _run_tasnet_frames(frames_flat, params)               # (B*F, L)
    out_even = out_flat[:B * n_even].reshape(B, n_even * FRAME_LEN)
    out_odd = out_flat[B * n_even:].reshape(B, n_odd * FRAME_LEN)

    out = jnp.pad(out_even, ((0, 0), (0, T_used - n_even * FRAME_LEN)))
    out = out + jnp.pad(out_odd, ((0, 0), (HOP, T_used - HOP - n_odd * FRAME_LEN)))

    # Window-count normalization; pure trace-time constant (numpy).
    wsum = np.zeros((T_used,), np.float32)
    wsum[:n_even * FRAME_LEN] += 1.0
    wsum[HOP:HOP + n_odd * FRAME_LEN] += 1.0
    out = out / np.maximum(wsum, 1.0)

    if T_used < T:                                 # trailing unframed samples -> 0
        out = jnp.pad(out, ((0, 0), (0, T - T_used)))
    return out


# --------------------------- pure-JAX reference (check) -------------------------
def _enhance_batch_ref(audio_2d, params):
    """Reference with gather framing / scatter overlap-add, same bf16 matmul casts."""
    B, T = audio_2d.shape
    we, w1, b1, w2, b2, wd = params
    F = (T - FRAME_LEN) // HOP + 1
    idx = jnp.arange(F)[:, None] * HOP + jnp.arange(FRAME_LEN)[None, :]
    frames = audio_2d[:, idx].astype(jnp.bfloat16)                   # (B, F, L)
    enc = jnp.maximum(
        jnp.einsum('bfl,ln->bfn', frames, we.astype(jnp.bfloat16),
                   preferred_element_type=jnp.float32), 0.0)
    h = jnp.maximum(
        jnp.einsum('bfn,nh->bfh', enc.astype(jnp.bfloat16), w1.astype(jnp.bfloat16),
                   preferred_element_type=jnp.float32) + b1, 0.0)
    mask = jax.nn.sigmoid(
        jnp.einsum('bfh,hn->bfn', h.astype(jnp.bfloat16), w2.astype(jnp.bfloat16),
                   preferred_element_type=jnp.float32) + b2)
    out_frames = jnp.einsum('bfn,nl->bfl', (enc * mask).astype(jnp.bfloat16),
                            wd.astype(jnp.bfloat16),
                            preferred_element_type=jnp.float32)
    out = jnp.zeros((B, T), jnp.float32).at[:, idx].add(out_frames)
    wsum = jnp.zeros((T,), jnp.float32).at[idx].add(jnp.ones((F, FRAME_LEN)))
    return out / jnp.maximum(wsum, 1.0)


# ------------------------------ SE_torch.forward -------------------------------
def se_forward(au, params):
    """Mirrors SE_torch.forward branching on audio rank / batch size."""
    audio, emotion = au['feature'], au['emotion']
    if audio.ndim > 1:
        if audio.shape[0] == 1:
            enh = _enhance_batch(audio.astype(jnp.float32), params)   # (1, T)
            audio_trans = enh[0][None, ...]                           # (1, T)
        else:
            enh = _enhance_batch(audio.astype(jnp.float32), params)   # (B, T)
            audio_trans = enh
    else:
        enh = _enhance_batch(audio.astype(jnp.float32)[None, :], params)
        audio_trans = enh[0]                                          # (T,)
    return {'feature': audio_trans, 'emotion': emotion}


# --------------------------- deterministic parameters --------------------------
def init_params(key):
    ks = jax.random.split(key, 6)
    scale = 0.1
    we = scale * jax.random.normal(ks[0], (FRAME_LEN, N_BASIS), jnp.float32)
    w1 = scale * jax.random.normal(ks[1], (N_BASIS, HIDDEN), jnp.float32)
    b1 = jnp.zeros((1, HIDDEN), jnp.float32)
    w2 = scale * jax.random.normal(ks[2], (HIDDEN, N_BASIS), jnp.float32)
    b2 = jnp.zeros((1, N_BASIS), jnp.float32)
    wd = scale * jax.random.normal(ks[3], (N_BASIS, FRAME_LEN), jnp.float32)
    return (we, w1, b1, w2, b2, wd)


if __name__ == "__main__":
    key = jax.random.PRNGKey(0)
    pkey, akey, ekey = jax.random.split(key, 3)
    params = init_params(pkey)

    B = 2
    F = 64
    T = (F - 1) * HOP + FRAME_LEN          # 520 samples
    audio = jax.random.normal(akey, (B, T), jnp.float32)
    emotion = jax.random.randint(ekey, (B,), 0, 4)

    au = {'feature': audio, 'emotion': emotion}
    out = se_forward(au, params)
    jax.block_until_ready(out['feature'])
    assert out['feature'].shape == (B, T)
    assert out['feature'].dtype == jnp.float32

    # Numerical check against the pure-JAX reference (same bf16 matmul precision).
    ref = _enhance_batch_ref(audio, params)
    np.testing.assert_allclose(np.asarray(out['feature']), np.asarray(ref),
                               atol=2e-2, rtol=2e-2)

    # Also exercise the 1-D (unbatched) branch of forward().
    out1d = se_forward({'feature': audio[0], 'emotion': emotion[0]}, params)
    jax.block_until_ready(out1d['feature'])
    assert out1d['feature'].shape == (T,)

    print("KERNEL_OK")
</pallas_src>

<mosaic_0001>
module attributes {stable_mosaic.version = 11 : i64} {
  func.func @_tasnet_kernel(%arg0: i32, %arg1: memref<16x128xbf16, #tpu.memory_space<vmem>>, %arg2: memref<64x16xbf16, #tpu.memory_space<vmem>>, %arg3: memref<64x64xbf16, #tpu.memory_space<vmem>>, %arg4: memref<64x1xf32, #tpu.memory_space<vmem>>, %arg5: memref<64x64xbf16, #tpu.memory_space<vmem>>, %arg6: memref<64x1xf32, #tpu.memory_space<vmem>>, %arg7: memref<16x64xbf16, #tpu.memory_space<vmem>>, %arg8: memref<16x128xf32, #tpu.memory_space<vmem>>) attributes {dimension_semantics = [#tpu.dimension_semantics<parallel>], iteration_bounds = array<i64: 1>, scalar_prefetch = 0 : i64, scratch_operands = 0 : i64, tpu.core_type = #tpu.core_type<tc>, window_params = [{transform_indices = @transform_0, window_bounds = array<i64: 16, 128>}, {pipeline_mode = #tpu.pipeline_mode<synchronous>, transform_indices = @transform_1, window_bounds = array<i64: 64, 16>}, {pipeline_mode = #tpu.pipeline_mode<synchronous>, transform_indices = @transform_2, window_bounds = array<i64: 64, 64>}, {pipeline_mode = #tpu.pipeline_mode<synchronous>, transform_indices = @transform_3, window_bounds = array<i64: 64, 1>}, {pipeline_mode = #tpu.pipeline_mode<synchronous>, transform_indices = @transform_4, window_bounds = array<i64: 64, 64>}, {pipeline_mode = #tpu.pipeline_mode<synchronous>, transform_indices = @transform_5, window_bounds = array<i64: 64, 1>}, {pipeline_mode = #tpu.pipeline_mode<synchronous>, transform_indices = @transform_6, window_bounds = array<i64: 16, 64>}, {transform_indices = @transform_7, window_bounds = array<i64: 16, 128>}]} {
    %c0 = arith.constant 0 : index
    %c0_0 = arith.constant 0 : index
    %0 = vector.load %arg1[%c0, %c0_0] : memref<16x128xbf16, #tpu.memory_space<vmem>>, vector<16x128xbf16>
    %c0_1 = arith.constant 0 : index
    %c0_2 = arith.constant 0 : index
    %1 = vector.load %arg2[%c0_1, %c0_2] : memref<64x16xbf16, #tpu.memory_space<vmem>>, vector<64x16xbf16>
    %cst = arith.constant dense<0.000000e+00> : vector<64x128xf32>
    %2 = tpu.matmul %1, %0, %cst {dimension_numbers = #tpu.dot_dimension_numbers<[1], [0], [0], [1], [0, 0, 1, 1], [], []>} : vector<64x16xbf16>, vector<16x128xbf16>, vector<64x128xf32> -> vector<64x128xf32>
    %cst_3 = arith.constant 0.000000e+00 : f32
    %3 = vector.broadcast %cst_3 : f32 to vector<64x128xf32>
    %4 = arith.maximumf %2, %3 : vector<64x128xf32>
    %c0_4 = arith.constant 0 : index
    %c0_5 = arith.constant 0 : index
    %5 = vector.load %arg3[%c0_4, %c0_5] : memref<64x64xbf16, #tpu.memory_space<vmem>>, vector<64x64xbf16>
    %6 = arith.truncf %4 : vector<64x128xf32> to vector<64x128xbf16>
    %cst_6 = arith.constant dense<0.000000e+00> : vector<64x128xf32>
    %7 = tpu.matmul %5, %6, %cst_6 {dimension_numbers = #tpu.dot_dimension_numbers<[1], [0], [0], [1], [0, 0, 1, 1], [], []>} : vector<64x64xbf16>, vector<64x128xbf16>, vector<64x128xf32> -> vector<64x128xf32>
    %c0_7 = arith.constant 0 : index
    %c0_8 = arith.constant 0 : index
    %8 = vector.load %arg4[%c0_7, %c0_8] : memref<64x1xf32, #tpu.memory_space<vmem>>, vector<64x1xf32>
    %9 = vector.broadcast %8 : vector<64x1xf32> to vector<64x128xf32>
    %10 = arith.addf %7, %9 : vector<64x128xf32>
    %cst_9 = arith.constant 0.000000e+00 : f32
    %11 = vector.broadcast %cst_9 : f32 to vector<64x128xf32>
    %12 = arith.maximumf %10, %11 : vector<64x128xf32>
    %c0_10 = arith.constant 0 : index
    %c0_11 = arith.constant 0 : index
    %13 = vector.load %arg5[%c0_10, %c0_11] : memref<64x64xbf16, #tpu.memory_space<vmem>>, vector<64x64xbf16>
    %14 = arith.truncf %12 : vector<64x128xf32> to vector<64x128xbf16>
    %cst_12 = arith.constant dense<0.000000e+00> : vector<64x128xf32>
    %15 = tpu.matmul %13, %14, %cst_12 {dimension_numbers = #tpu.dot_dimension_numbers<[1], [0], [0], [1], [0, 0, 1, 1], [], []>} : vector<64x64xbf16>, vector<64x128xbf16>, vector<64x128xf32> -> vector<64x128xf32>
    %c0_13 = arith.constant 0 : index
    %c0_14 = arith.constant 0 : index
    %16 = vector.load %arg6[%c0_13, %c0_14] : memref<64x1xf32, #tpu.memory_space<vmem>>, vector<64x1xf32>
    %17 = vector.broadcast %16 : vector<64x1xf32> to vector<64x128xf32>
    %18 = arith.addf %15, %17 : vector<64x128xf32>
    %19 = arith.negf %18 : vector<64x128xf32>
    %20 = math.exp %19 : vector<64x128xf32>
    %cst_15 = arith.constant 1.000000e+00 : f32
    %21 = vector.broadcast %cst_15 : f32 to vector<64x128xf32>
    %22 = arith.addf %21, %20 : vector<64x128xf32>
    %23 = arith.divf %21, %22 : vector<64x128xf32>
    %24 = arith.mulf %4, %23 : vector<64x128xf32>
    %25 = arith.truncf %24 : vector<64x128xf32> to vector<64x128xbf16>
    %c0_16 = arith.constant 0 : index
    %c0_17 = arith.constant 0 : index
    %26 = vector.load %arg7[%c0_16, %c0_17] : memref<16x64xbf16, #tpu.memory_space<vmem>>, vector<16x64xbf16>
    %cst_18 = arith.constant dense<0.000000e+00> : vector<16x128xf32>
    %27 = tpu.matmul %26, %25, %cst_18 {dimension_numbers = #tpu.dot_dimension_numbers<[1], [0], [0], [1], [0, 0, 1, 1], [], []>} : vector<16x64xbf16>, vector<64x128xbf16>, vector<16x128xf32> -> vector<16x128xf32>
    %c0_19 = arith.constant 0 : index
    %c0_20 = arith.constant 0 : index
    %28 = vector.load %arg8[%c0_19, %c0_20] : memref<16x128xf32, #tpu.memory_space<vmem>>, vector<16x128xf32>
    tpu.vector_store %arg8[%c0_19, %c0_20], %27 {strides = array<i32>} : memref<16x128xf32, #tpu.memory_space<vmem>>, vector<16x128xf32>,
    return
  }
  func.func @transform_0(%arg0: i32) -> (i32, i32) {
    %c0_i32 = arith.constant 0 : i32
    %c0_i32_0 = arith.constant 0 : i32
    return %c0_i32, %arg0 : i32, i32
  }
  func.func @transform_1(%arg0: i32) -> (i32, i32) {
    %c0_i32 = arith.constant 0 : i32
    %c0_i32_0 = arith.constant 0 : i32
    %c0_i32_1 = arith.constant 0 : i32
    return %c0_i32, %c0_i32_0 : i32, i32
  }
  func.func @transform_2(%arg0: i32) -> (i32, i32) {
    %c0_i32 = arith.constant 0 : i32
    %c0_i32_0 = arith.constant 0 : i32
    %c0_i32_1 = arith.constant 0 : i32
    return %c0_i32, %c0_i32_0 : i32, i32
  }
  func.func @transform_3(%arg0: i32) -> (i32, i32) {
    %c0_i32 = arith.constant 0 : i32
    %c0_i32_0 = arith.constant 0 : i32
    %c0_i32_1 = arith.constant 0 : i32
    return %c0_i32, %c0_i32_0 : i32, i32
  }
  func.func @transform_4(%arg0: i32) -> (i32, i32) {
    %c0_i32 = arith.constant 0 : i32
    %c0_i32_0 = arith.constant 0 : i32
    %c0_i32_1 = arith.constant 0 : i32
    return %c0_i32, %c0_i32_0 : i32, i32
  }
  func.func @transform_5(%arg0: i32) -> (i32, i32) {
    %c0_i32 = arith.constant 0 : i32
    %c0_i32_0 = arith.constant 0 : i32
    %c0_i32_1 = arith.constant 0 : i32
    return %c0_i32, %c0_i32_0 : i32, i32
  }
  func.func @transform_6(%arg0: i32) -> (i32, i32) {
    %c0_i32 = arith.constant 0 : i32
    %c0_i32_0 = arith.constant 0 : i32
    %c0_i32_1 = arith.constant 0 : i32
    return %c0_i32, %c0_i32_0 : i32, i32
  }
  func.func @transform_7(%arg0: i32) -> (i32, i32) {
    %c0_i32 = arith.constant 0 : i32
    %c0_i32_0 = arith.constant 0 : i32
    return %c0_i32, %arg0 : i32, i32
  }
}

</mosaic_0001>

<llo_original>
// kernel: tpu_custom_call.1
$region0: #{tpu_custom_call.1}
  #allocation0 [shape = 'u32[]', space=smem, size = 0x4, offset = 0x4, fixed_abs, tag = 'smem constant byte address 0x4 - core index']
  #allocation1 [shape = 'u32[144,128]{1,0:T(1,128)}', space=vmem, size = 0x12000, scoped, tag = 'internal scratch']
  %s0 = inlined_call_operand.vmem [shape: bf16[16,128], index: 0, kind: input, shape index: {}]
  %s1 = inlined_call_operand.vmem [shape: bf16[64,16], index: 1, kind: input, shape index: {}]
  %s2 = inlined_call_operand.vmem [shape: bf16[64,64], index: 2, kind: input, shape index: {}]
  %s3 = inlined_call_operand.vmem [shape: f32[64,1], index: 3, kind: input, shape index: {}]
  %s4 = inlined_call_operand.vmem [shape: bf16[64,64], index: 4, kind: input, shape index: {}]
  %s5 = inlined_call_operand.vmem [shape: f32[64,1], index: 5, kind: input, shape index: {}]
  %s6 = inlined_call_operand.vmem [shape: bf16[16,64], index: 6, kind: input, shape index: {}]
  %s7 = inlined_call_operand.hbm [shape: f32[16,128], index: 7, kind: output, shape index: {}]
  %s8 = sld [smem:[#allocation0]]
  $region38: #{tpu_custom_call.1} parent=0
    _
  %s10 = ssub.s32 1, %s8
  %s11 = scalar_select 0, %s10, %s8
  $region1: #{tpu_custom_call.1} parent=0
    #allocation2 [shape = 'u8[8192]{0}', space=vmem, size = 0x2000, scoped, tag = 'output window, operand 0, single buffered']
    #allocation3 [shape = 's32[1]{0}', space=sflag, size = 0x4, scoped, tag = 'scoped memory for tpu_custom_call.1']
    %12 = vsyncpa [#allocation3], 0
    // Predicated region
    $region2: #{tpu_custom_call.1} parent=1 // pred_check
      _
    $region3: #{tpu_custom_call.1} parent=1 // pred_check_branch
      %14 = sbr.rel (0) target = $region5
    $region4: #{tpu_custom_call.1} parent=1 // pred_region
      _
    $region5: #{tpu_custom_call.1} parent=1 // pred_fallthru
      _
    // Predicated region
    $region6: #{tpu_custom_call.1} parent=1 // pred_check
      _
    $region7: #{tpu_custom_call.1} parent=1 // pred_check_branch
      %16 = sbr.rel (0) target = $region9
    $region8: #{tpu_custom_call.1} parent=1 // pred_region
      _
    $region9: #{tpu_custom_call.1} parent=1 // pred_fallthru
      _
    // Predicated region
    $region10: #{tpu_custom_call.1} parent=1 // pred_check
      _
    $region11: #{tpu_custom_call.1} parent=1 // pred_check_branch
      %18 = sbr.rel (0) target = $region13
    $region12: #{tpu_custom_call.1} parent=1 // pred_region
      _
    $region13: #{tpu_custom_call.1} parent=1 // pred_fallthru
      _
    // Predicated region
    $region14: #{tpu_custom_call.1} parent=1 // pred_check
      _
    $region15: #{tpu_custom_call.1} parent=1 // pred_check_branch
      %20 = sbr.rel (0) target = $region17
    $region16: #{tpu_custom_call.1} parent=1 // pred_region
      _
    $region17: #{tpu_custom_call.1} parent=1 // pred_fallthru
      _
    // Predicated region
    $region18: #{tpu_custom_call.1} parent=1 // pred_check
      _
    $region19: #{tpu_custom_call.1} parent=1 // pred_check_branch
      %22 = sbr.rel (0) target = $region21
    $region20: #{tpu_custom_call.1} parent=1 // pred_region
      _
    $region21: #{tpu_custom_call.1} parent=1 // pred_fallthru
      _
    // Predicated region
    $region22: #{tpu_custom_call.1} parent=1 // pred_check
      _
    $region23: #{tpu_custom_call.1} parent=1 // pred_check_branch
      %24 = sbr.rel (0) target = $region25
    $region24: #{tpu_custom_call.1} parent=1 // pred_region
      _
    $region25: #{tpu_custom_call.1} parent=1 // pred_fallthru
      _
    // Predicated region
    $region26: #{tpu_custom_call.1} parent=1 // pred_check
      _
    $region27: #{tpu_custom_call.1} parent=1 // pred_check_branch
      %26 = sbr.rel (0) target = $region29
    $region28: #{tpu_custom_call.1} parent=1 // pred_region
      _
    $region29: #{tpu_custom_call.1} parent=1 // pred_fallthru
      _
    %v28 = vld [vmem:[%s0] sm:$0xf]
    %v29 = vld [vmem:[%s0 + $0x4] sm:$0xf]
    %v30 = vld [vmem:[%s1] sm:$0xf]
    %v31 = vld [vmem:[%s1 + $0x4] sm:$0xf]
    %v32 = vld [vmem:[%s1 + $0x8] sm:$0xf]
    %v33 = vld [vmem:[%s1 + $0xc] sm:$0xf]
    %v34 = vld [vmem:[%s1 + $0x10] sm:$0xf]
    %v35 = vld [vmem:[%s1 + $0x14] sm:$0xf]
    %v36 = vld [vmem:[%s1 + $0x18] sm:$0xf]
    %v37 = vld [vmem:[%s1 + $0x1c] sm:$0xf]
    %v46 = vunpack.c.l.b16 %v30
    %v47 = vunpack.c.l.b16 %v31
    %v48 = vunpack.c.l.b16 %v32
    %v49 = vunpack.c.l.b16 %v33
    %v50 = vunpack.c.l.b16 %v34
    %v51 = vunpack.c.l.b16 %v35
    %v52 = vunpack.c.l.b16 %v36
    %v53 = vunpack.c.l.b16 %v37
    %v54 = vpack.c.b16 %v47, %v46
    %v55 = vpack.c.b16 %v49, %v48
    %v56 = vpack.c.b16 %v51, %v50
    %v57 = vpack.c.b16 %v53, %v52
    %v60 = vunpack.c.l.b16 %v28
    %v61 = vunpack.c.l.b16 %v29
    %v62 = vpack.c.b16 %v61, %v60
    %vm64 = vcmask 130048
    %v66 = vsel %vm64, %v54, 0
    %v69 = vsel %vm64, %v55, 0
    %v72 = vsel %vm64, %v56, 0
    %v75 = vsel %vm64, %v57, 0
    %77 = vmatprep.subr.bf16.mxu0 0
    %78 = vmatpush1.bf16.msra.mxu0 %v62
    %79 = vmatprep.subr.bf16.mxu0 0
    %80 = vmatpush1.bf16.msra.mxu0 0
    %81 = vmatprep.subr.bf16.mxu0 0
    %82 = vmatpush1.bf16.msra.mxu0 0
    %83 = vmatprep.subr.bf16.mxu0 0
    %84 = vmatpush1.bf16.msra.mxu0 0
    %85 = vmatprep.subr.bf16.mxu0 0
    %86 = vmatpush1.bf16.msra.mxu0 0
    %87 = vmatprep.subr.bf16.mxu0 0
    %88 = vmatpush1.bf16.msra.mxu0 0
    %89 = vmatprep.subr.bf16.mxu0 0
    %90 = vmatpush1.bf16.msra.mxu0 0
    %91 = vmatprep.subr.bf16.mxu0 0
    %92 = vmatpush1.bf16.msra.mxu0 0
    %93 = vmatprep.subr.bf16.mxu0 0
    %94 = vmatpush1.bf16.msra.mxu0 0
    %95 = vmatprep.subr.bf16.mxu0 0
    %96 = vmatpush1.bf16.msra.mxu0 0
    %97 = vmatprep.subr.bf16.mxu0 0
    %98 = vmatpush1.bf16.msra.mxu0 0
    %99 = vmatprep.subr.bf16.mxu0 0
    %100 = vmatpush1.bf16.msra.mxu0 0
    %101 = vmatprep.subr.bf16.mxu0 0
    %102 = vmatpush1.bf16.msra.mxu0 0
    %103 = vmatprep.subr.bf16.mxu0 0
    %104 = vmatpush1.bf16.msra.mxu0 0
    %105 = vmatprep.subr.bf16.mxu0 0
    %106 = vmatpush1.bf16.msra.mxu0 0
    %107 = vmatprep.subr.bf16.mxu0 0
    %108 = vmatpush1.bf16.msra.mxu0 0
    %109 = vmatprep.mubr.bf16.mxu0 0
    %110 = vmatmul.mubr.bf16.gmra.mrb[0].mxu0 %v66
    %v111 = vpop.f32.mrb[0].mxu0
    %v112 = vadd.f32 0.0, %v111
    %v113 = vpop.f32.mrb[0].mxu0
    %v114 = vpop.f32.mrb[0].mxu0
    %v115 = vadd.f32 0.0, %v114
    %v116 = vpop.f32.mrb[0].mxu0
    %117 = vmatprep.mubr.bf16.mxu0 0
    %118 = vmatmul.mubr.bf16.gmra.mrb[0].mxu0 %v69
    %v119 = vpop.f32.mrb[0].mxu0
    %v120 = vadd.f32 0.0, %v119
    %v121 = vpop.f32.mrb[0].mxu0
    %v122 = vpop.f32.mrb[0].mxu0
    %v123 = vadd.f32 0.0, %v122
    %v124 = vpop.f32.mrb[0].mxu0
    %125 = vmatprep.mubr.bf16.mxu0 0
    %126 = vmatmul.mubr.bf16.gmra.mrb[0].mxu0 %v72
    %v127 = vpop.f32.mrb[0].mxu0
    %v128 = vadd.f32 0.0, %v127
    %v129 = vpop.f32.mrb[0].mxu0
    %v130 = vpop.f32.mrb[0].mxu0
    %v131 = vadd.f32 0.0, %v130
    %v132 = vpop.f32.mrb[0].mxu0
    %133 = vmatprep.mubr.bf16.mxu0 0
    %134 = vmatmul.mubr.bf16.gmra.mrb[0].mxu0 %v75
    %v135 = vpop.f32.mrb[0].mxu0
    %v136 = vadd.f32 0.0, %v135
    %v137 = vpop.f32.mrb[0].mxu0
    %v138 = vpop.f32.mrb[0].mxu0
    %v139 = vadd.f32 0.0, %v138
    %v140 = vpop.f32.mrb[0].mxu0
    %141 = vdwg.mxu0
    %v142 = vmax.f32 %v112, 0.0
    %v143 = vmax.f32 %v115, 0.0
    %v144 = vmax.f32 %v120, 0.0
    %v145 = vmax.f32 %v123, 0.0
    %v146 = vmax.f32 %v128, 0.0
    %v147 = vmax.f32 %v131, 0.0
    %v148 = vmax.f32 %v136, 0.0
    %v149 = vmax.f32 %v139, 0.0
    %v150 = vld [vmem:[%s2] sm:$0xf]
    %v151 = vld [vmem:[%s2 + $0x4] sm:$0xf]
    %v152 = vld [vmem:[%s2 + $0x8] sm:$0xf]
    %v153 = vld [vmem:[%s2 + $0xc] sm:$0xf]
    %v154 = vld [vmem:[%s2 + $0x10] sm:$0xf]
    %v155 = vld [vmem:[%s2 + $0x14] sm:$0xf]
    %v156 = vld [vmem:[%s2 + $0x18] sm:$0xf]
    %v157 = vld [vmem:[%s2 + $0x1c] sm:$0xf]
    %v158 = vpack.c.bf16 %v143, %v142
    %v159 = vpack.c.bf16 %v145, %v144
    %v160 = vpack.c.bf16 %v147, %v146
    %v161 = vpack.c.bf16 %v149, %v148
    %v162 = vld [vmem:[%s3] sm:$0xff]
    %v163 = vld [vmem:[%s3 + $0x8] sm:$0xff]
    %v164 = vld [vmem:[%s3 + $0x10] sm:$0xff]
    %v165 = vld [vmem:[%s3 + $0x18] sm:$0xff]
    %v166 = vld [vmem:[%s3 + $0x20] sm:$0xff]
    %v167 = vld [vmem:[%s3 + $0x28] sm:$0xff]
    %v168 = vld [vmem:[%s3 + $0x30] sm:$0xff]
    %v169 = vld [vmem:[%s3 + $0x38] sm:$0xff]
    %171 = vset.pattern.permute.xlu0 0
    %172 = vperm.xlu0 %171, %v162
    %v173 = vpop.permute.xlu0 %172
    %176 = vset.pattern.permute.xlu0 0
    %177 = vperm.xlu0 %176, %v163
    %v178 = vpop.permute.xlu0 %177
    %181 = vset.pattern.permute.xlu0 0
    %182 = vperm.xlu0 %181, %v164
    %v183 = vpop.permute.xlu0 %182
    %186 = vset.pattern.permute.xlu0 0
    %187 = vperm.xlu0 %186, %v165
    %v188 = vpop.permute.xlu0 %187
    %191 = vset.pattern.permute.xlu0 0
    %192 = vperm.xlu0 %191, %v166
    %v193 = vpop.permute.xlu0 %192
    %196 = vset.pattern.permute.xlu0 0
    %197 = vperm.xlu0 %196, %v167
    %v198 = vpop.permute.xlu0 %197
    %201 = vset.pattern.permute.xlu0 0
    %202 = vperm.xlu0 %201, %v168
    %v203 = vpop.permute.xlu0 %202
    %206 = vset.pattern.permute.xlu0 0
    %207 = vperm.xlu0 %206, %v169
    %v208 = vpop.permute.xlu0 %207
    %v218 = vunpack.c.l.b16 %v150
    %v219 = vunpack.c.l.b16 %v151
    %v220 = vunpack.c.l.b16 %v152
    %v221 = vunpack.c.l.b16 %v153
    %v222 = vunpack.c.l.b16 %v154
    %v223 = vunpack.c.l.b16 %v155
    %v224 = vunpack.c.l.b16 %v156
    %v225 = vunpack.c.l.b16 %v157
    %v226 = vpack.c.b16 %v219, %v218
    %v227 = vpack.c.b16 %v221, %v220
    %v228 = vpack.c.b16 %v223, %v222
    %v229 = vpack.c.b16 %v225, %v224
    %vm230 = vcmask 523264
    %v232 = vsel %vm230, %v226, 0
    %v235 = vsel %vm230, %v227, 0
    %v238 = vsel %vm230, %v228, 0
    %v241 = vsel %vm230, %v229, 0
    %243 = vmatprep.subr.bf16.mxu0 0
    %244 = vmatpush1.bf16.msra.mxu0 %v158
    %245 = vmatprep.subr.bf16.mxu0 0
    %246 = vmatpush1.bf16.msra.mxu0 %v159
    %247 = vmatprep.subr.bf16.mxu0 0
    %248 = vmatpush1.bf16.msra.mxu0 %v160
    %249 = vmatprep.subr.bf16.mxu0 0
    %250 = vmatpush1.bf16.msra.mxu0 %v161
    %251 = vmatprep.subr.bf16.mxu0 0
    %252 = vmatpush1.bf16.msra.mxu0 0
    %253 = vmatprep.subr.bf16.mxu0 0
    %254 = vmatpush1.bf16.msra.mxu0 0
    %255 = vmatprep.subr.bf16.mxu0 0
    %256 = vmatpush1.bf16.msra.mxu0 0
    %257 = vmatprep.subr.bf16.mxu0 0
    %258 = vmatpush1.bf16.msra.mxu0 0
    %259 = vmatprep.subr.bf16.mxu0 0
    %260 = vmatpush1.bf16.msra.mxu0 0
    %261 = vmatprep.subr.bf16.mxu0 0
    %262 = vmatpush1.bf16.msra.mxu0 0
    %263 = vmatprep.subr.bf16.mxu0 0
    %264 = vmatpush1.bf16.msra.mxu0 0
    %265 = vmatprep.subr.bf16.mxu0 0
    %266 = vmatpush1.bf16.msra.mxu0 0
    %267 = vmatprep.subr.bf16.mxu0 0
    %268 = vmatpush1.bf16.msra.mxu0 0
    %269 = vmatprep.subr.bf16.mxu0 0
    %270 = vmatpush1.bf16.msra.mxu0 0
    %271 = vmatprep.subr.bf16.mxu0 0
    %272 = vmatpush1.bf16.msra.mxu0 0
    %273 = vmatprep.subr.bf16.mxu0 0
    %274 = vmatpush1.bf16.msra.mxu0 0
    %275 = vmatprep.mubr.bf16.mxu0 0
    %276 = vmatmul.mubr.bf16.gmra.mrb[0].mxu0 %v232
    %v277 = vpop.f32.mrb[0].mxu0
    %v278 = vadd.f32 %v173, %v277
    %v279 = vpop.f32.mrb[0].mxu0
    %v280 = vpop.f32.mrb[0].mxu0
    %v281 = vadd.f32 %v178, %v280
    %v282 = vpop.f32.mrb[0].mxu0
    %283 = vmatprep.mubr.bf16.mxu0 0
    %284 = vmatmul.mubr.bf16.gmra.mrb[0].mxu0 %v235
    %v285 = vpop.f32.mrb[0].mxu0
    %v286 = vadd.f32 %v183, %v285
    %v287 = vpop.f32.mrb[0].mxu0
    %v288 = vpop.f32.mrb[0].mxu0
    %v289 = vadd.f32 %v188, %v288
    %v290 = vpop.f32.mrb[0].mxu0
    %291 = vmatprep.mubr.bf16.mxu0 0
    %292 = vmatmul.mubr.bf16.gmra.mrb[0].mxu0 %v238
    %v293 = vpop.f32.mrb[0].mxu0
    %v294 = vadd.f32 %v193, %v293
    %v295 = vpop.f32.mrb[0].mxu0
    %v296 = vpop.f32.mrb[0].mxu0
    %v297 = vadd.f32 %v198, %v296
    %v298 = vpop.f32.mrb[0].mxu0
    %299 = vmatprep.mubr.bf16.mxu0 0
    %300 = vmatmul.mubr.bf16.gmra.mrb[0].mxu0 %v241
    %v301 = vpop.f32.mrb[0].mxu0
    %v302 = vadd.f32 %v203, %v301
    %v303 = vpop.f32.mrb[0].mxu0
    %v304 = vpop.f32.mrb[0].mxu0
    %v305 = vadd.f32 %v208, %v304
    %v306 = vpop.f32.mrb[0].mxu0
    %307 = vdwg.mxu0
    %v308 = vmax.f32 %v278, 0.0
    %v309 = vmax.f32 %v281, 0.0
    %v310 = vmax.f32 %v286, 0.0
    %v311 = vmax.f32 %v289, 0.0
    %v312 = vmax.f32 %v294, 0.0
    %v313 = vmax.f32 %v297, 0.0
    %v314 = vmax.f32 %v302, 0.0
    %v315 = vmax.f32 %v305, 0.0
    %v316 = vld [vmem:[%s4] sm:$0xf]
    %v317 = vld [vmem:[%s4 + $0x4] sm:$0xf]
    %v318 = vld [vmem:[%s4 + $0x8] sm:$0xf]
    %v319 = vld [vmem:[%s4 + $0xc] sm:$0xf]
    %v320 = vld [vmem:[%s4 + $0x10] sm:$0xf]
    %v321 = vld [vmem:[%s4 + $0x14] sm:$0xf]
    %v322 = vld [vmem:[%s4 + $0x18] sm:$0xf]
    %v323 = vld [vmem:[%s4 + $0x1c] sm:$0xf]
    %v324 = vpack.c.bf16 %v309, %v308
    %v325 = vpack.c.bf16 %v311, %v310
    %v326 = vpack.c.bf16 %v313, %v312
    %v327 = vpack.c.bf16 %v315, %v314
    %v328 = vld [vmem:[%s5] sm:$0xff]
    %v329 = vld [vmem:[%s5 + $0x8] sm:$0xff]
    %v330 = vld [vmem:[%s5 + $0x10] sm:$0xff]
    %v331 = vld [vmem:[%s5 + $0x18] sm:$0xff]
    %v332 = vld [vmem:[%s5 + $0x20] sm:$0xff]
    %v333 = vld [vmem:[%s5 + $0x28] sm:$0xff]
    %v334 = vld [vmem:[%s5 + $0x30] sm:$0xff]
    %v335 = vld [vmem:[%s5 + $0x38] sm:$0xff]
    %337 = vset.pattern.permute.xlu0 0
    %338 = vperm.xlu0 %337, %v328
    %v339 = vpop.permute.xlu0 %338
    %342 = vset.pattern.permute.xlu0 0
    %343 = vperm.xlu0 %342, %v329
    %v344 = vpop.permute.xlu0 %343
    %347 = vset.pattern.permute.xlu0 0
    %348 = vperm.xlu0 %347, %v330
    %v349 = vpop.permute.xlu0 %348
    %352 = vset.pattern.permute.xlu0 0
    %353 = vperm.xlu0 %352, %v331
    %v354 = vpop.permute.xlu0 %353
    %357 = vset.pattern.permute.xlu0 0
    %358 = vperm.xlu0 %357, %v332
    %v359 = vpop.permute.xlu0 %358
    %362 = vset.pattern.permute.xlu0 0
    %363 = vperm.xlu0 %362, %v333
    %v364 = vpop.permute.xlu0 %363
    %367 = vset.pattern.permute.xlu0 0
    %368 = vperm.xlu0 %367, %v334
    %v369 = vpop.permute.xlu0 %368
    %372 = vset.pattern.permute.xlu0 0
    %373 = vperm.xlu0 %372, %v335
    %v374 = vpop.permute.xlu0 %373
    %v384 = vunpack.c.l.b16 %v316
    %v385 = vunpack.c.l.b16 %v317
    %v386 = vunpack.c.l.b16 %v318
    %v387 = vunpack.c.l.b16 %v319
    %v388 = vunpack.c.l.b16 %v320
    %v389 = vunpack.c.l.b16 %v321
    %v390 = vunpack.c.l.b16 %v322
    %v391 = vunpack.c.l.b16 %v323
    %v392 = vpack.c.b16 %v385, %v384
    %v393 = vpack.c.b16 %v387, %v386
    %v394 = vpack.c.b16 %v389, %v388
    %v395 = vpack.c.b16 %v391, %v390
    %v397 = vsel %vm230, %v392, 0
    %v400 = vsel %vm230, %v393, 0
    %v403 = vsel %vm230, %v394, 0
    %v406 = vsel %vm230, %v395, 0
    %408 = vmatprep.subr.bf16.mxu0 0
    %409 = vmatpush1.bf16.msra.mxu0 %v324
    %410 = vmatprep.subr.bf16.mxu0 0
    %411 = vmatpush1.bf16.msra.mxu0 %v325
    %412 = vmatprep.subr.bf16.mxu0 0
    %413 = vmatpush1.bf16.msra.mxu0 %v326
    %414 = vmatprep.subr.bf16.mxu0 0
    %415 = vmatpush1.bf16.msra.mxu0 %v327
    %416 = vmatprep.subr.bf16.mxu0 0
    %417 = vmatpush1.bf16.msra.mxu0 0
    %418 = vmatprep.subr.bf16.mxu0 0
    %419 = vmatpush1.bf16.msra.mxu0 0
    %420 = vmatprep.subr.bf16.mxu0 0
    %421 = vmatpush1.bf16.msra.mxu0 0
    %422 = vmatprep.subr.bf16.mxu0 0
    %423 = vmatpush1.bf16.msra.mxu0 0
    %424 = vmatprep.subr.bf16.mxu0 0
    %425 = vmatpush1.bf16.msra.mxu0 0
    %426 = vmatprep.subr.bf16.mxu0 0
    %427 = vmatpush1.bf16.msra.mxu0 0
    %428 = vmatprep.subr.bf16.mxu0 0
    %429 = vmatpush1.bf16.msra.mxu0 0
    %430 = vmatprep.subr.bf16.mxu0 0
    %431 = vmatpush1.bf16.msra.mxu0 0
    %432 = vmatprep.subr.bf16.mxu0 0
    %433 = vmatpush1.bf16.msra.mxu0 0
    %434 = vmatprep.subr.bf16.mxu0 0
    %435 = vmatpush1.bf16.msra.mxu0 0
    %436 = vmatprep.subr.bf16.mxu0 0
    %437 = vmatpush1.bf16.msra.mxu0 0
    %438 = vmatprep.subr.bf16.mxu0 0
    %439 = vmatpush1.bf16.msra.mxu0 0
    %440 = vmatprep.mubr.bf16.mxu0 0
    %441 = vmatmul.mubr.bf16.gmra.mrb[0].mxu0 %v397
    %v442 = vpop.f32.mrb[0].mxu0
    %v443 = vadd.f32 %v339, %v442
    %v444 = vpop.f32.mrb[0].mxu0
    %v445 = vpop.f32.mrb[0].mxu0
    %v446 = vadd.f32 %v344, %v445
    %v447 = vpop.f32.mrb[0].mxu0
    %448 = vmatprep.mubr.bf16.mxu0 0
    %449 = vmatmul.mubr.bf16.gmra.mrb[0].mxu0 %v400
    %v450 = vpop.f32.mrb[0].mxu0
    %v451 = vadd.f32 %v349, %v450
    %v452 = vpop.f32.mrb[0].mxu0
    %v453 = vpop.f32.mrb[0].mxu0
    %v454 = vadd.f32 %v354, %v453
    %v455 = vpop.f32.mrb[0].mxu0
    %456 = vmatprep.mubr.bf16.mxu0 0
    %457 = vmatmul.mubr.bf16.gmra.mrb[0].mxu0 %v403
    %v458 = vpop.f32.mrb[0].mxu0
    %v459 = vadd.f32 %v359, %v458
    %v460 = vpop.f32.mrb[0].mxu0
    %v461 = vpop.f32.mrb[0].mxu0
    %v462 = vadd.f32 %v364, %v461
    %v463 = vpop.f32.mrb[0].mxu0
    %464 = vmatprep.mubr.bf16.mxu0 0
    %465 = vmatmul.mubr.bf16.gmra.mrb[0].mxu0 %v406
    %v466 = vpop.f32.mrb[0].mxu0
    %v467 = vadd.f32 %v369, %v466
    %v468 = vpop.f32.mrb[0].mxu0
    %v469 = vpop.f32.mrb[0].mxu0
    %v470 = vadd.f32 %v374, %v469
    %v471 = vpop.f32.mrb[0].mxu0
    %472 = vdwg.mxu0
    %v473 = vxor.u32 %v443, 2147483648
    %v474 = vxor.u32 %v446, 2147483648
    %v475 = vxor.u32 %v451, 2147483648
    %v476 = vxor.u32 %v454, 2147483648
    %v477 = vxor.u32 %v459, 2147483648
    %v478 = vxor.u32 %v462, 2147483648
    %v479 = vxor.u32 %v467, 2147483648
    %v480 = vxor.u32 %v470, 2147483648
    %v481 = vmul.f32 %v473, 1.442695
    %v482 = vpow.pop %v481
    %v483 = vmul.f32 %v474, 1.442695
    %v484 = vpow.pop %v483
    %v485 = vmul.f32 %v475, 1.442695
    %v486 = vpow.pop %v485
    %v487 = vmul.f32 %v476, 1.442695
    %v488 = vpow.pop %v487
    %v489 = vmul.f32 %v477, 1.442695
    %v490 = vpow.pop %v489
    %v491 = vmul.f32 %v478, 1.442695
    %v492 = vpow.pop %v491
    %v493 = vmul.f32 %v479, 1.442695
    %v494 = vpow.pop %v493
    %v495 = vmul.f32 %v480, 1.442695
    %v496 = vpow.pop %v495
    %v497 = vadd.f32 %v482, 1.0
    %v498 = vadd.f32 %v484, 1.0
    %v499 = vadd.f32 %v486, 1.0
    %v500 = vadd.f32 %v488, 1.0
    %v501 = vadd.f32 %v490, 1.0
    %v502 = vadd.f32 %v492, 1.0
    %v503 = vadd.f32 %v494, 1.0
    %v504 = vadd.f32 %v496, 1.0
    %v505 = vrcp.pop %v497
    %v506 = vmul.f32 1.0, %v505
    %v507 = vrcp.pop %v498
    %v508 = vmul.f32 1.0, %v507
    %v509 = vrcp.pop %v499
    %v510 = vmul.f32 1.0, %v509
    %v511 = vrcp.pop %v500
    %v512 = vmul.f32 1.0, %v511
    %v513 = vrcp.pop %v501
    %v514 = vmul.f32 1.0, %v513
    %v515 = vrcp.pop %v502
    %v516 = vmul.f32 1.0, %v515
    %v517 = vrcp.pop %v503
    %v518 = vmul.f32 1.0, %v517
    %v519 = vrcp.pop %v504
    %v520 = vmul.f32 1.0, %v519
    %v521 = vmul.f32 %v142, %v506
    %v522 = vmul.f32 %v143, %v508
    %v523 = vmul.f32 %v144, %v510
    %v524 = vmul.f32 %v145, %v512
    %v525 = vmul.f32 %v146, %v514
    %v526 = vmul.f32 %v147, %v516
    %v527 = vmul.f32 %v148, %v518
    %v528 = vmul.f32 %v149, %v520
    %v529 = vpack.c.bf16 %v522, %v521
    %v530 = vpack.c.bf16 %v524, %v523
    %v531 = vpack.c.bf16 %v526, %v525
    %v532 = vpack.c.bf16 %v528, %v527
    %v533 = vld [vmem:[%s6] sm:$0xf]
    %v534 = vld [vmem:[%s6 + $0x4] sm:$0xf]
    %v537 = vunpack.c.l.b16 %v533
    %v538 = vunpack.c.l.b16 %v534
    %v539 = vpack.c.b16 %v538, %v537
    %v541 = vsel %vm230, %v539, 0
    %543 = vmatprep.subr.bf16.mxu0 0
    %544 = vmatpush1.bf16.msra.mxu0 %v529
    %545 = vmatprep.subr.bf16.mxu0 0
    %546 = vmatpush1.bf16.msra.mxu0 %v530
    %547 = vmatprep.subr.bf16.mxu0 0
    %548 = vmatpush1.bf16.msra.mxu0 %v531
    %549 = vmatprep.subr.bf16.mxu0 0
    %550 = vmatpush1.bf16.msra.mxu0 %v532
    %551 = vmatprep.subr.bf16.mxu0 0
    %552 = vmatpush1.bf16.msra.mxu0 0
    %553 = vmatprep.subr.bf16.mxu0 0
    %554 = vmatpush1.bf16.msra.mxu0 0
    %555 = vmatprep.subr.bf16.mxu0 0
    %556 = vmatpush1.bf16.msra.mxu0 0
    %557 = vmatprep.subr.bf16.mxu0 0
    %558 = vmatpush1.bf16.msra.mxu0 0
    %559 = vmatprep.subr.bf16.mxu0 0
    %560 = vmatpush1.bf16.msra.mxu0 0
    %561 = vmatprep.subr.bf16.mxu0 0
    %562 = vmatpush1.bf16.msra.mxu0 0
    %563 = vmatprep.subr.bf16.mxu0 0
    %564 = vmatpush1.bf16.msra.mxu0 0
    %565 = vmatprep.subr.bf16.mxu0 0
    %566 = vmatpush1.bf16.msra.mxu0 0
    %567 = vmatprep.subr.bf16.mxu0 0
    %568 = vmatpush1.bf16.msra.mxu0 0
    %569 = vmatprep.subr.bf16.mxu0 0
    %570 = vmatpush1.bf16.msra.mxu0 0
    %571 = vmatprep.subr.bf16.mxu0 0
    %572 = vmatpush1.bf16.msra.mxu0 0
    %573 = vmatprep.subr.bf16.mxu0 0
    %574 = vmatpush1.bf16.msra.mxu0 0
    %575 = vmatprep.mubr.bf16.mxu0 0
    %576 = vmatmul.mubr.bf16.gmra.mrb[0].mxu0 %v541
    %v577 = vpop.f32.mrb[0].mxu0
    %v578 = vadd.f32 0.0, %v577
    %v579 = vpop.f32.mrb[0].mxu0
    %v580 = vpop.f32.mrb[0].mxu0
    %v581 = vadd.f32 0.0, %v580
    %v582 = vpop.f32.mrb[0].mxu0
    %583 = vdwg.mxu0
    %584 = vst [vmem:[#allocation2] sm:$0xff] %v578
    %585 = vst [vmem:[#allocation2 + $0x8] sm:$0xff] %v581
    // Predicated region
    $region30: #{tpu_custom_call.1} parent=1 // pred_check
      _
    $region31: #{tpu_custom_call.1} parent=1 // pred_check_branch
      %587 = sbr.rel (0) target = $region33
    $region32: #{tpu_custom_call.1} parent=1 // pred_region
      %s589 = ssub.s32 256, 256
      %590 = vsyncadd [#allocation3], %s589
      %s591 = sshll.u32 [#allocation2], 4
      %s592 = int_to_ptr.vmem [resolvable:$true] %s591
      %597 = dma.vmem_to_hbm [thread:$0]  %s592, 256, %s7, [#allocation3], 128, 128, 8
    $region33: #{tpu_custom_call.1} parent=1 // pred_fallthru
      _
    // Predicated region
    $region34: #{tpu_custom_call.1} parent=1 // pred_check
      _
    $region35: #{tpu_custom_call.1} parent=1 // pred_check_branch
      %599 = sbr.rel (0) target = $region37
    $region36: #{tpu_custom_call.1} parent=1 // pred_region
      %600 = dma.done [#allocation3], 256
    $region37: #{tpu_custom_call.1} parent=1 // pred_fallthru
      _
    %601 = vsyncpa [#allocation3], 1

</llo_original>
